<compile_context>
chip_gen: v7x
topology: tpu7x:2x2x1
jax: 0.10.0
libtpu: 0.0.40
codegen_flags: <defaults>
</compile_context>

<pallas_src>
import jax
import jax.numpy as jnp
from jax.experimental import pallas as pl
from jax.experimental.pallas import tpu as pltpu


# ----------------------------------------------------------------------------
# Interpolation-matrix builders (plain JAX glue, computed once per call).
# ----------------------------------------------------------------------------
def _bilinear_row_matrix(in_size: int, scale: int) -> jnp.ndarray:
    """(out_size, in_size) matrix M so that M @ x performs 1-D bilinear
    upsampling with PyTorch align_corners=False semantics."""
    out_size = in_size * scale
    dst = jnp.arange(out_size, dtype=jnp.float32)
    src = (dst + 0.5) / float(scale) - 0.5
    src = jnp.maximum(src, 0.0)                       # PyTorch clamps negative src
    i0 = jnp.clip(jnp.floor(src).astype(jnp.int32), 0, in_size - 1)
    i1 = jnp.clip(i0 + 1, 0, in_size - 1)
    w1 = src - i0.astype(jnp.float32)
    w0 = 1.0 - w1
    oh0 = jax.nn.one_hot(i0, in_size, dtype=jnp.float32)
    oh1 = jax.nn.one_hot(i1, in_size, dtype=jnp.float32)
    return w0[:, None] * oh0 + w1[:, None] * oh1      # (out_size, in_size)


def _nearest_row_matrix(in_size: int, scale: int) -> jnp.ndarray:
    """(out_size, in_size) 0/1 matrix for PyTorch mode='nearest' upsampling."""
    out_size = in_size * scale
    dst = jnp.arange(out_size, dtype=jnp.int32)
    src = jnp.clip(dst // scale, 0, in_size - 1)
    return jax.nn.one_hot(src, in_size, dtype=jnp.float32)


# ----------------------------------------------------------------------------
# Kernel builders.  Grid = (B, C // CB); one (batch, CB-channel block) per step.
# ----------------------------------------------------------------------------
def _make_kernel_merge(cb, H, W, Ho, Wo, fuse_w):
    """Main path (H % 8 == 0): leading-dim<->sublane merge is layout-trivial.

    W-side: one (CB*H, W) @ (W, Wo|2*Wo) MXU matmul (shared LHS) into a
    (CB, 2H, Wo) VMEM scratch slab (bilinear rows [:H], nearest rows [H:]).
    H-side: per-channel single (Ho, 2H) @ (2H, Wo) matmul with the mixing
    scalar pre-folded into the (Ho, 2H) matrix — no broadcast, no add.
    """
    if fuse_w:
        # Wo % 128 == 0 -> lane-aligned halves of the fused product.
        def kernel(x_ref, wcat_ref, hcat_ref, o_ref, t_ref):
            x2 = x_ref[0].reshape(cb * H, W)
            t = jnp.dot(x2, wcat_ref[...], preferred_element_type=jnp.float32)
            t_ref[:, :H, :] = t[:, :Wo].reshape(cb, H, Wo)
            t_ref[:, H:, :] = t[:, Wo:].reshape(cb, H, Wo)
            for c in range(cb):
                o_ref[0, c] = jnp.dot(
                    hcat_ref[...], t_ref[c],
                    preferred_element_type=jnp.float32).astype(o_ref.dtype)
    else:
        def kernel(x_ref, bw_ref, nw_ref, hcat_ref, o_ref, t_ref):
            x2 = x_ref[0].reshape(cb * H, W)
            t_ref[:, :H, :] = jnp.dot(
                x2, bw_ref[...],
                preferred_element_type=jnp.float32).reshape(cb, H, Wo)
            t_ref[:, H:, :] = jnp.dot(
                x2, nw_ref[...],
                preferred_element_type=jnp.float32).reshape(cb, H, Wo)
            for c in range(cb):
                o_ref[0, c] = jnp.dot(
                    hcat_ref[...], t_ref[c],
                    preferred_element_type=jnp.float32).astype(o_ref.dtype)
    return kernel


def _make_kernel_nomerge(cb, H, W, Ho, Wo):
    """Fallback path (H % 8 != 0): per-channel 2-D matmuls, no reshape/merge.
    Keeps channel blocking (no CB=1 regression); the sublane concat at offset
    H is a small one-off relayout per channel."""
    def kernel(x_ref, bw_ref, nw_ref, hcat_ref, o_ref):
        bw = bw_ref[...]
        nw = nw_ref[...]
        hcat = hcat_ref[...]
        for c in range(cb):
            xc = x_ref[0, c]                                        # (H, W)
            tb = jnp.dot(xc, bw, preferred_element_type=jnp.float32)
            tn = jnp.dot(xc, nw, preferred_element_type=jnp.float32)
            tcat = jnp.concatenate([tb, tn], axis=0)                # (2H, Wo)
            o_ref[0, c] = jnp.dot(
                hcat, tcat, preferred_element_type=jnp.float32).astype(o_ref.dtype)
    return kernel


# ----------------------------------------------------------------------------
# Sizing helpers.
# ----------------------------------------------------------------------------
def _vmem_capacity_bytes():
    """Per-core VMEM capacity; conservative 64 MiB fallback (v7x) if the query
    is unavailable."""
    try:
        info = pltpu.get_tpu_info()
        cap = getattr(info, "vmem_capacity_bytes", None)
        if cap:
            return int(cap)
    except Exception:
        pass
    return 64 << 20


def _pick_channel_block(B, C, H, W, Ho, Wo, budget_bytes, max_unroll=32):
    """Largest divisor of C whose per-step VMEM footprint fits the budget."""
    # Per-step constants: double-buffered weight operands (bw/nw or wcat, hcat)
    # and one (Ho, Wo) pre-store temp.
    const = 4 * (2 * (2 * W * Wo) + 2 * (2 * Ho * H) + Ho * Wo)
    # Per-channel: double-buffered input/output blocks, the (2H, Wo) scratch
    # slab, and a same-size matmul temp before the scratch store.
    per_c = 4 * (2 * H * W + 2 * Ho * Wo + 4 * H * Wo)
    avail = budget_bytes - const
    if avail < per_c:
        cb = 1
    else:
        cb = int(min(C, avail // per_c, max_unroll))
    if B == 1 and C >= 2:
        # Megacore (v7x, 2 TCs): keep >= 2 iterations on a parallel grid axis.
        cb = min(cb, max(1, C // 2))
    cb = max(cb, 1)
    while C % cb != 0:
        cb -= 1
    return cb


# ----------------------------------------------------------------------------
# Public wrapper.
# ----------------------------------------------------------------------------
def mixupsample(x: jnp.ndarray, mixing: jnp.ndarray, scale_factor: int = 2) -> jnp.ndarray:
    """x: (B, C, H, W) float32, mixing: scalar float32 (learned parameter)."""
    assert scale_factor != 1
    s = int(scale_factor)
    assert s == scale_factor, "mixupsample: integer scale factors only"
    B, C, H, W = x.shape
    Ho, Wo = H * s, W * s

    m = jnp.asarray(mixing, dtype=jnp.float32)
    bw = _bilinear_row_matrix(W, s).T                    # (W, Wo)
    nw = _nearest_row_matrix(W, s).T                     # (W, Wo)
    # Mixing folded into the fused H-side matrix: (Ho, 2H) = [m*Bh | (1-m)*Nh].
    hcat = jnp.concatenate(
        [m * _bilinear_row_matrix(H, s), (1.0 - m) * _nearest_row_matrix(H, s)],
        axis=1)

    merge_hc = (H % 8 == 0)            # leading-dim <-> sublane merge is trivial
    fuse_w = merge_hc and (Wo % 128 == 0)   # lane-aligned halves of fused W matmul

    # Generation-aware VMEM budgeting (128 MiB v5e/v6e vs 64 MiB v7x).
    total_vmem = _vmem_capacity_bytes()
    vmem_limit = int(min(total_vmem // 2, 64 << 20))
    cb_budget = vmem_limit // 2
    CB = _pick_channel_block(B, C, H, W, Ho, Wo, cb_budget)
    grid = (B, C // CB)

    x_spec = pl.BlockSpec((1, CB, H, W), lambda b, c: (b, c, 0, 0))
    h_spec = pl.BlockSpec((Ho, 2 * H), lambda b, c: (0, 0))
    out_spec = pl.BlockSpec((1, CB, Ho, Wo), lambda b, c: (b, c, 0, 0))

    if merge_hc:
        kernel = _make_kernel_merge(CB, H, W, Ho, Wo, fuse_w)
        scratch_shapes = [pltpu.VMEM((CB, 2 * H, Wo), jnp.float32)]
        if fuse_w:
            weights = (jnp.concatenate([bw, nw], axis=1),)               # (W, 2Wo)
            weight_specs = [pl.BlockSpec((W, 2 * Wo), lambda b, c: (0, 0))]
        else:
            weights = (bw, nw)
            weight_specs = [pl.BlockSpec((W, Wo), lambda b, c: (0, 0)),
                            pl.BlockSpec((W, Wo), lambda b, c: (0, 0))]
    else:
        kernel = _make_kernel_nomerge(CB, H, W, Ho, Wo)
        scratch_shapes = []
        weights = (bw, nw)
        weight_specs = [pl.BlockSpec((W, Wo), lambda b, c: (0, 0)),
                        pl.BlockSpec((W, Wo), lambda b, c: (0, 0))]

    return pl.pallas_call(
        kernel,
        out_shape=jax.ShapeDtypeStruct((B, C, Ho, Wo), x.dtype),
        grid=grid,
        in_specs=[x_spec] + weight_specs + [h_spec],
        out_specs=out_spec,
        scratch_shapes=scratch_shapes,
        compiler_params=pltpu.CompilerParams(
            dimension_semantics=("parallel", "parallel"),
            vmem_limit_bytes=vmem_limit,
        ),
    )(x, *weights, hcat)


# ----------------------------------------------------------------------------
# Independent gather-form reference (matches PyTorch semantics).
# ----------------------------------------------------------------------------
def _mixupsample_reference(x, mixing, s):
    B, C, H, W = x.shape

    def lin(n):
        dst = jnp.arange(n * s, dtype=jnp.float32)
        src = jnp.maximum((dst + 0.5) / s - 0.5, 0.0)
        i0 = jnp.clip(jnp.floor(src).astype(jnp.int32), 0, n - 1)
        i1 = jnp.clip(i0 + 1, 0, n - 1)
        w1 = src - i0.astype(jnp.float32)
        return i0, i1, 1.0 - w1, w1

    i0, i1, w0, w1 = lin(H)
    xh = (x[:, :, i0, :] * w0[None, None, :, None]
          + x[:, :, i1, :] * w1[None, None, :, None])
    j0, j1, v0, v1 = lin(W)
    bil = xh[:, :, :, j0] * v0 + xh[:, :, :, j1] * v1
    near = x[:, :, jnp.arange(H * s) // s, :][:, :, :, jnp.arange(W * s) // s]
    return mixing * bil + (1.0 - mixing) * near


if __name__ == "__main__":
    key = jax.random.PRNGKey(0)
    B, C, H, W = 2, 4, 16, 16
    scale = 2

    x = jax.random.normal(key, (B, C, H, W), dtype=jnp.float32)
    # nn.Parameter(torch.tensor(0.5)) -> deterministic init at 0.5
    mixing = jnp.float32(0.5)

    out = mixupsample(x, mixing, scale_factor=scale)
    out = jax.block_until_ready(out)

    assert out.shape == (B, C, H * scale, W * scale), out.shape
    assert out.dtype == x.dtype
    assert bool(jnp.all(jnp.isfinite(out)))

    ref = _mixupsample_reference(x, mixing, scale)
    err = float(jnp.max(jnp.abs(out - ref)))
    assert jnp.allclose(out, ref, rtol=1e-4, atol=1e-4), err

    print("KERNEL_OK")
</pallas_src>

<mosaic_0001>
module attributes {stable_mosaic.version = 11 : i64} {
  func.func @kernel(%arg0: i32, %arg1: i32, %arg2: memref<1x4x16x16xf32, #tpu.memory_space<vmem>>, %arg3: memref<16x32xf32, #tpu.memory_space<vmem>>, %arg4: memref<16x32xf32, #tpu.memory_space<vmem>>, %arg5: memref<32x32xf32, #tpu.memory_space<vmem>>, %arg6: memref<1x4x32x32xf32, #tpu.memory_space<vmem>>, %arg7: memref<4x32x32xf32, #tpu.memory_space<vmem>>) attributes {dimension_semantics = [#tpu.dimension_semantics<parallel>, #tpu.dimension_semantics<parallel>], iteration_bounds = array<i64: 2, 1>, scalar_prefetch = 0 : i64, scratch_operands = 1 : i64, tpu.core_type = #tpu.core_type<tc>, window_params = [{transform_indices = @transform_0, window_bounds = array<i64: 1, 4, 16, 16>}, {pipeline_mode = #tpu.pipeline_mode<synchronous>, transform_indices = @transform_1, window_bounds = array<i64: 16, 32>}, {pipeline_mode = #tpu.pipeline_mode<synchronous>, transform_indices = @transform_2, window_bounds = array<i64: 16, 32>}, {pipeline_mode = #tpu.pipeline_mode<synchronous>, transform_indices = @transform_3, window_bounds = array<i64: 32, 32>}, {transform_indices = @transform_4, window_bounds = array<i64: 1, 4, 32, 32>}]} {
    %c0 = arith.constant 0 : index
    %c0_0 = arith.constant 0 : index
    %c0_1 = arith.constant 0 : index
    %c0_2 = arith.constant 0 : index
    %0 = vector.load %arg2[%c0, %c0_0, %c0_1, %c0_2] : memref<1x4x16x16xf32, #tpu.memory_space<vmem>>, vector<1x4x16x16xf32>
    %1 = vector.shape_cast %0 : vector<1x4x16x16xf32> to vector<4x16x16xf32>
    %2 = vector.shape_cast %1 : vector<4x16x16xf32> to vector<64x16xf32>
    %c0_3 = arith.constant 0 : index
    %c0_4 = arith.constant 0 : index
    %3 = vector.load %arg3[%c0_3, %c0_4] : memref<16x32xf32, #tpu.memory_space<vmem>>, vector<16x32xf32>
    %cst = arith.constant dense<0.000000e+00> : vector<64x32xf32>
    %4 = tpu.matmul %2, %3, %cst {dimension_numbers = #tpu.dot_dimension_numbers<[1], [0], [0], [1], [0, 0, 1, 1], [], []>} : vector<64x16xf32>, vector<16x32xf32>, vector<64x32xf32> -> vector<64x32xf32>
    %5 = vector.shape_cast %4 : vector<64x32xf32> to vector<4x16x32xf32>
    %c0_5 = arith.constant 0 : index
    %c0_6 = arith.constant 0 : index
    %c0_7 = arith.constant 0 : index
    %6 = vector.load %arg7[%c0_5, %c0_6, %c0_7] : memref<4x32x32xf32, #tpu.memory_space<vmem>>, vector<4x16x32xf32>
    tpu.vector_store %arg7[%c0_5, %c0_6, %c0_7], %5 {strides = array<i32>} : memref<4x32x32xf32, #tpu.memory_space<vmem>>, vector<4x16x32xf32>,
    %c0_8 = arith.constant 0 : index
    %c0_9 = arith.constant 0 : index
    %7 = vector.load %arg4[%c0_8, %c0_9] : memref<16x32xf32, #tpu.memory_space<vmem>>, vector<16x32xf32>
    %cst_10 = arith.constant dense<0.000000e+00> : vector<64x32xf32>
    %8 = tpu.matmul %2, %7, %cst_10 {dimension_numbers = #tpu.dot_dimension_numbers<[1], [0], [0], [1], [0, 0, 1, 1], [], []>} : vector<64x16xf32>, vector<16x32xf32>, vector<64x32xf32> -> vector<64x32xf32>
    %9 = vector.shape_cast %8 : vector<64x32xf32> to vector<4x16x32xf32>
    %c0_11 = arith.constant 0 : index
    %c16 = arith.constant 16 : index
    %c0_12 = arith.constant 0 : index
    %10 = vector.load %arg7[%c0_11, %c16, %c0_12] : memref<4x32x32xf32, #tpu.memory_space<vmem>>, vector<4x16x32xf32>
    tpu.vector_store %arg7[%c0_11, %c16, %c0_12], %9 {strides = array<i32>} : memref<4x32x32xf32, #tpu.memory_space<vmem>>, vector<4x16x32xf32>,
    %c0_13 = arith.constant 0 : index
    %c0_14 = arith.constant 0 : index
    %11 = vector.load %arg5[%c0_13, %c0_14] : memref<32x32xf32, #tpu.memory_space<vmem>>, vector<32x32xf32>
    %c0_15 = arith.constant 0 : index
    %c0_16 = arith.constant 0 : index
    %c0_17 = arith.constant 0 : index
    %12 = vector.load %arg7[%c0_15, %c0_16, %c0_17] : memref<4x32x32xf32, #tpu.memory_space<vmem>>, vector<1x32x32xf32>
    %13 = vector.shape_cast %12 : vector<1x32x32xf32> to vector<32x32xf32>
    %cst_18 = arith.constant dense<0.000000e+00> : vector<32x32xf32>
    %14 = tpu.matmul %11, %13, %cst_18 {dimension_numbers = #tpu.dot_dimension_numbers<[1], [0], [0], [1], [0, 0, 1, 1], [], []>} : vector<32x32xf32>, vector<32x32xf32>, vector<32x32xf32> -> vector<32x32xf32>
    %c0_19 = arith.constant 0 : index
    %c0_20 = arith.constant 0 : index
    %c0_21 = arith.constant 0 : index
    %c0_22 = arith.constant 0 : index
    %15 = vector.load %arg6[%c0_19, %c0_20, %c0_21, %c0_22] : memref<1x4x32x32xf32, #tpu.memory_space<vmem>>, vector<1x1x32x32xf32>
    %16 = vector.shape_cast %15 : vector<1x1x32x32xf32> to vector<32x32xf32>
    %17 = vector.shape_cast %14 : vector<32x32xf32> to vector<1x1x32x32xf32>
    tpu.vector_store %arg6[%c0_19, %c0_20, %c0_21, %c0_22], %17 {strides = array<i32>} : memref<1x4x32x32xf32, #tpu.memory_space<vmem>>, vector<1x1x32x32xf32>,
    %c0_23 = arith.constant 0 : index
    %c0_24 = arith.constant 0 : index
    %18 = vector.load %arg5[%c0_23, %c0_24] : memref<32x32xf32, #tpu.memory_space<vmem>>, vector<32x32xf32>
    %c1 = arith.constant 1 : index
    %c0_25 = arith.constant 0 : index
    %c0_26 = arith.constant 0 : index
    %19 = vector.load %arg7[%c1, %c0_25, %c0_26] : memref<4x32x32xf32, #tpu.memory_space<vmem>>, vector<1x32x32xf32>
    %20 = vector.shape_cast %19 : vector<1x32x32xf32> to vector<32x32xf32>
    %cst_27 = arith.constant dense<0.000000e+00> : vector<32x32xf32>
    %21 = tpu.matmul %18, %20, %cst_27 {dimension_numbers = #tpu.dot_dimension_numbers<[1], [0], [0], [1], [0, 0, 1, 1], [], []>} : vector<32x32xf32>, vector<32x32xf32>, vector<32x32xf32> -> vector<32x32xf32>
    %c0_28 = arith.constant 0 : index
    %c1_29 = arith.constant 1 : index
    %c0_30 = arith.constant 0 : index
    %c0_31 = arith.constant 0 : index
    %22 = vector.load %arg6[%c0_28, %c1_29, %c0_30, %c0_31] : memref<1x4x32x32xf32, #tpu.memory_space<vmem>>, vector<1x1x32x32xf32>
    %23 = vector.shape_cast %22 : vector<1x1x32x32xf32> to vector<32x32xf32>
    %24 = vector.shape_cast %21 : vector<32x32xf32> to vector<1x1x32x32xf32>
    tpu.vector_store %arg6[%c0_28, %c1_29, %c0_30, %c0_31], %24 {strides = array<i32>} : memref<1x4x32x32xf32, #tpu.memory_space<vmem>>, vector<1x1x32x32xf32>,
    %c0_32 = arith.constant 0 : index
    %c0_33 = arith.constant 0 : index
    %25 = vector.load %arg5[%c0_32, %c0_33] : memref<32x32xf32, #tpu.memory_space<vmem>>, vector<32x32xf32>
    %c2 = arith.constant 2 : index
    %c0_34 = arith.constant 0 : index
    %c0_35 = arith.constant 0 : index
    %26 = vector.load %arg7[%c2, %c0_34, %c0_35] : memref<4x32x32xf32, #tpu.memory_space<vmem>>, vector<1x32x32xf32>
    %27 = vector.shape_cast %26 : vector<1x32x32xf32> to vector<32x32xf32>
    %cst_36 = arith.constant dense<0.000000e+00> : vector<32x32xf32>
    %28 = tpu.matmul %25, %27, %cst_36 {dimension_numbers = #tpu.dot_dimension_numbers<[1], [0], [0], [1], [0, 0, 1, 1], [], []>} : vector<32x32xf32>, vector<32x32xf32>, vector<32x32xf32> -> vector<32x32xf32>
    %c0_37 = arith.constant 0 : index
    %c2_38 = arith.constant 2 : index
    %c0_39 = arith.constant 0 : index
    %c0_40 = arith.constant 0 : index
    %29 = vector.load %arg6[%c0_37, %c2_38, %c0_39, %c0_40] : memref<1x4x32x32xf32, #tpu.memory_space<vmem>>, vector<1x1x32x32xf32>
    %30 = vector.shape_cast %29 : vector<1x1x32x32xf32> to vector<32x32xf32>
    %31 = vector.shape_cast %28 : vector<32x32xf32> to vector<1x1x32x32xf32>
    tpu.vector_store %arg6[%c0_37, %c2_38, %c0_39, %c0_40], %31 {strides = array<i32>} : memref<1x4x32x32xf32, #tpu.memory_space<vmem>>, vector<1x1x32x32xf32>,
    %c0_41 = arith.constant 0 : index
    %c0_42 = arith.constant 0 : index
    %32 = vector.load %arg5[%c0_41, %c0_42] : memref<32x32xf32, #tpu.memory_space<vmem>>, vector<32x32xf32>
    %c3 = arith.constant 3 : index
    %c0_43 = arith.constant 0 : index
    %c0_44 = arith.constant 0 : index
    %33 = vector.load %arg7[%c3, %c0_43, %c0_44] : memref<4x32x32xf32, #tpu.memory_space<vmem>>, vector<1x32x32xf32>
    %34 = vector.shape_cast %33 : vector<1x32x32xf32> to vector<32x32xf32>
    %cst_45 = arith.constant dense<0.000000e+00> : vector<32x32xf32>
    %35 = tpu.matmul %32, %34, %cst_45 {dimension_numbers = #tpu.dot_dimension_numbers<[1], [0], [0], [1], [0, 0, 1, 1], [], []>} : vector<32x32xf32>, vector<32x32xf32>, vector<32x32xf32> -> vector<32x32xf32>
    %c0_46 = arith.constant 0 : index
    %c3_47 = arith.constant 3 : index
    %c0_48 = arith.constant 0 : index
    %c0_49 = arith.constant 0 : index
    %36 = vector.load %arg6[%c0_46, %c3_47, %c0_48, %c0_49] : memref<1x4x32x32xf32, #tpu.memory_space<vmem>>, vector<1x1x32x32xf32>
    %37 = vector.shape_cast %36 : vector<1x1x32x32xf32> to vector<32x32xf32>
    %38 = vector.shape_cast %35 : vector<32x32xf32> to vector<1x1x32x32xf32>
    tpu.vector_store %arg6[%c0_46, %c3_47, %c0_48, %c0_49], %38 {strides = array<i32>} : memref<1x4x32x32xf32, #tpu.memory_space<vmem>>, vector<1x1x32x32xf32>,
    return
  }
  func.func @transform_0(%arg0: i32, %arg1: i32) -> (i32, i32, i32, i32) {
    %c0_i32 = arith.constant 0 : i32
    %c0_i32_0 = arith.constant 0 : i32
    %c0_i32_1 = arith.constant 0 : i32
    return %arg0, %arg1, %c0_i32, %c0_i32_0 : i32, i32, i32, i32
  }
  func.func @transform_1(%arg0: i32, %arg1: i32) -> (i32, i32) {
    %c0_i32 = arith.constant 0 : i32
    %c0_i32_0 = arith.constant 0 : i32
    %c0_i32_1 = arith.constant 0 : i32
    return %c0_i32, %c0_i32_0 : i32, i32
  }
  func.func @transform_2(%arg0: i32, %arg1: i32) -> (i32, i32) {
    %c0_i32 = arith.constant 0 : i32
    %c0_i32_0 = arith.constant 0 : i32
    %c0_i32_1 = arith.constant 0 : i32
    return %c0_i32, %c0_i32_0 : i32, i32
  }
  func.func @transform_3(%arg0: i32, %arg1: i32) -> (i32, i32) {
    %c0_i32 = arith.constant 0 : i32
    %c0_i32_0 = arith.constant 0 : i32
    %c0_i32_1 = arith.constant 0 : i32
    return %c0_i32, %c0_i32_0 : i32, i32
  }
  func.func @transform_4(%arg0: i32, %arg1: i32) -> (i32, i32, i32, i32) {
    %c0_i32 = arith.constant 0 : i32
    %c0_i32_0 = arith.constant 0 : i32
    %c0_i32_1 = arith.constant 0 : i32
    return %arg0, %arg1, %c0_i32, %c0_i32_0 : i32, i32, i32, i32
  }
}

</mosaic_0001>

<llo_original>
// kernel: tpu_custom_call.1
$region0: #{tpu_custom_call.1}
  #allocation0 [shape = 'u32[]', space=smem, size = 0x4, offset = 0x4, fixed_abs, tag = 'smem constant byte address 0x4 - core index']
  #allocation1 [shape = 'u32[144,128]{1,0:T(1,128)}', space=vmem, size = 0x12000, scoped, tag = 'internal scratch']
  #allocation2 [shape = 'f32[4,32,32]{2,1,0:T(8,128)}', space=vmem, size = 0x10000, scoped, tag = 'scratch operand']
  %s0 = inlined_call_operand.hbm [shape: f32[2,4,16,16], index: 0, kind: input, shape index: {}]
  %s1 = inlined_call_operand.hbm [shape: f32[16,32], index: 1, kind: input, shape index: {}]
  %s2 = inlined_call_operand.hbm [shape: f32[16,32], index: 2, kind: input, shape index: {}]
  %s3 = inlined_call_operand.hbm [shape: f32[32,32], index: 3, kind: input, shape index: {}]
  %s4 = inlined_call_operand.hbm [shape: f32[2,4,32,32], index: 4, kind: output, shape index: {}]
  %s5 = sld [smem:[#allocation0]]
  $region65: #{tpu_custom_call.1} parent=0
    _
  %s7 = ssub.s32 1, %s5
  %s8 = scalar_select 0, %s7, %s5
  $region1: #{tpu_custom_call.1} parent=0
    #allocation3 [shape = 'u8[65536]{0}', space=vmem, size = 0x10000, scoped, tag = 'input window, operand 0']
    #allocation4 [shape = 's32[2]{0}', space=sflag, size = 0x8, scoped, tag = 'scoped memory for tpu_custom_call.1']
    #allocation5 [shape = 's32[2]{0}', space=sflag, size = 0x8, scoped, tag = 'scoped memory for tpu_custom_call.1']
    #allocation6 [shape = 'u8[8192]{0}', space=vmem, size = 0x2000, scoped, tag = 'input window, operand 1, single buffered']
    #allocation7 [shape = 's32[1]{0}', space=sflag, size = 0x4, scoped, tag = 'scoped memory for tpu_custom_call.1']
    #allocation8 [shape = 'u8[8192]{0}', space=vmem, size = 0x2000, scoped, tag = 'input window, operand 2, single buffered']
    #allocation9 [shape = 'u8[16384]{0}', space=vmem, size = 0x4000, scoped, tag = 'input window, operand 3, single buffered']
    #allocation10 [shape = 's32[1]{0}', space=sflag, size = 0x4, scoped, tag = 'scoped memory for tpu_custom_call.1']
    #allocation11 [shape = 'u8[131072]{0}', space=vmem, size = 0x20000, scoped, tag = 'output window, operand 0']
    %9 = vsyncpa [#allocation4], 0
    %s10 = scalar_lea.sflag [#allocation4], 1
    %11 = vsyncpa %s10, 0
    %12 = vsyncpa [#allocation7], 0
    %13 = vsyncpa [#allocation10], 0
    %14 = vsyncpa [#allocation5], 0
    %s15 = scalar_lea.sflag [#allocation5], 1
    %16 = vsyncpa %s15, 0
    loop: start=0, step=1, limit=4
    $region2: #{tpu_custom_call.1} parent=1 // loop_pre_header
      _
    $region3: #{tpu_custom_call.1} parent=1 // loop_header
      %s18 = sphi 0, %s22
      %p19 = scmp.ge.s32.totalorder %s18, 4
      %s25 = sphi 0, %s37
      %s26 = sphi 0, %s33
      %s27 = sphi 0, %s25
      %s28 = sphi 0, %s26
      %s29 = sphi 0, %s27
      %s30 = sphi 0, %s28
      %s42 = sphi 0, %s44
      %s45 = sphi 0, %s42
      %s46 = sphi 0, %s45
      %s62 = sphi 0, %s46
      %s66 = sphi 0, %s66
      %s68 = sphi 0, %s66
      %s69 = sphi 0, %s68
      %s83 = sphi 0, %s69
      %s87 = sphi 0, %s87
      %s89 = sphi 0, %s87
      %s90 = sphi 0, %s89
      %s104 = sphi 0, %s90
      %s108 = sphi 0, %s108
      %s110 = sphi 0, %s108
      %s111 = sphi 0, %s110
      %s125 = sphi 0, %s111
      %s133 = sphi 0, %s135
      %s136 = sphi 0, %s133
      %s137 = sphi 0, %s136
      %s153 = sphi 0, %s137
    $region4: #{tpu_custom_call.1} parent=1 // loop_header_branch
      %21 = sbr.rel (%p19) target = $region8
    $region5: #{tpu_custom_call.1} parent=1 // loop_body
      %s23 = ssub.s32 %s18, 1
      %s24 = ssub.s32 %s18, 2
      %s31 = sadd.s32 1, %s26
      %p32 = scmp.ge.s32.totalorder %s31, 1
      %s33 = scalar_select %p32, 0, %s31
      %s34 = sadd.s32 1, %s25
      %s35 = scalar_select %p32, %s34, %s25
      %p36 = scmp.ge.s32.totalorder %s35, 2
      %s37 = scalar_select %p36, 0, %s35
      %s38 = ssub.s32 %s25, %s37
      %s39 = ssub.s32 %s26, %s33
      %s40 = sor.u32 %s38, %s39
      %p41 = scmp.eq.s32.totalorder %s40, 0
      %s43 = sadd.s32 %s42, 1
      %s44 = scalar_select %p41, %s42, %s43
      %p47 = pneg %p41
      %p48 = scmp.eq.s32.totalorder %s18, 1
      %p49 = por %p47, %p48
      %p50 = scmp.ne.s32.totalorder %s42, %s45
      %p51 = scmp.eq.s32.totalorder %s18, 0
      %p52 = por %p50, %p51
      %p53 = scmp.ne.s32.totalorder %s42, %s45
      %p54 = scmp.eq.s32.totalorder %s23, 1
      %p55 = por %p53, %p54
      %p56 = scmp.ne.s32.totalorder %s45, %s46
      %p57 = scmp.eq.s32.totalorder %s23, 0
      %p58 = por %p56, %p57
      %p59 = scmp.ne.s32.totalorder %s45, %s46
      %p60 = scmp.eq.s32.totalorder %s24, 1
      %p61 = por %p59, %p60
      %p63 = scmp.ne.s32.totalorder %s46, %s62
      %p64 = scmp.eq.s32.totalorder %s24, 0
      %p65 = por %p63, %p64
      %s67 = sadd.s32 %s66, 1
      %p70 = scmp.eq.s32.totalorder %s18, 1
      %p71 = scmp.ne.s32.totalorder %s66, %s68
      %p72 = scmp.eq.s32.totalorder %s18, 0
      %p73 = por %p71, %p72
      %p74 = scmp.ne.s32.totalorder %s66, %s68
      %p75 = scmp.eq.s32.totalorder %s23, 1
      %p76 = por %p74, %p75
      %p77 = scmp.ne.s32.totalorder %s68, %s69
      %p78 = scmp.eq.s32.totalorder %s23, 0
      %p79 = por %p77, %p78
      %p80 = scmp.ne.s32.totalorder %s68, %s69
      %p81 = scmp.eq.s32.totalorder %s24, 1
      %p82 = por %p80, %p81
      %p84 = scmp.ne.s32.totalorder %s69, %s83
      %p85 = scmp.eq.s32.totalorder %s24, 0
      %p86 = por %p84, %p85
      %s88 = sadd.s32 %s87, 1
      %p91 = scmp.eq.s32.totalorder %s18, 1
      %p92 = scmp.ne.s32.totalorder %s87, %s89
      %p93 = scmp.eq.s32.totalorder %s18, 0
      %p94 = por %p92, %p93
      %p95 = scmp.ne.s32.totalorder %s87, %s89
      %p96 = scmp.eq.s32.totalorder %s23, 1
      %p97 = por %p95, %p96
      %p98 = scmp.ne.s32.totalorder %s89, %s90
      %p99 = scmp.eq.s32.totalorder %s23, 0
      %p100 = por %p98, %p99
      %p101 = scmp.ne.s32.totalorder %s89, %s90
      %p102 = scmp.eq.s32.totalorder %s24, 1
      %p103 = por %p101, %p102
      %p105 = scmp.ne.s32.totalorder %s90, %s104
      %p106 = scmp.eq.s32.totalorder %s24, 0
      %p107 = por %p105, %p106
      %s109 = sadd.s32 %s108, 1
      %p112 = scmp.eq.s32.totalorder %s18, 1
      %p113 = scmp.ne.s32.totalorder %s108, %s110
      %p114 = scmp.eq.s32.totalorder %s18, 0
      %p115 = por %p113, %p114
      %p116 = scmp.ne.s32.totalorder %s108, %s110
      %p117 = scmp.eq.s32.totalorder %s23, 1
      %p118 = por %p116, %p117
      %p119 = scmp.ne.s32.totalorder %s110, %s111
      %p120 = scmp.eq.s32.totalorder %s23, 0
      %p121 = por %p119, %p120
      %p122 = scmp.ne.s32.totalorder %s110, %s111
      %p123 = scmp.eq.s32.totalorder %s24, 1
      %p124 = por %p122, %p123
      %p126 = scmp.ne.s32.totalorder %s111, %s125
      %p127 = scmp.eq.s32.totalorder %s24, 0
      %p128 = por %p126, %p127
      %s129 = ssub.s32 %s25, %s37
      %s130 = ssub.s32 %s26, %s33
      %s131 = sor.u32 %s129, %s130
      %p132 = scmp.eq.s32.totalorder %s131, 0
      %s134 = sadd.s32 %s133, 1
      %s135 = scalar_select %p132, %s133, %s134
      %p138 = pneg %p132
      %p139 = scmp.eq.s32.totalorder %s18, 1
      %p140 = por %p138, %p139
      %p141 = scmp.ne.s32.totalorder %s133, %s136
      %p142 = scmp.eq.s32.totalorder %s18, 0
      %p143 = por %p141, %p142
      %p144 = scmp.ne.s32.totalorder %s133, %s136
      %p145 = scmp.eq.s32.totalorder %s23, 1
      %p146 = por %p144, %p145
      %p147 = scmp.ne.s32.totalorder %s136, %s137
      %p148 = scmp.eq.s32.totalorder %s23, 0
      %p149 = por %p147, %p148
      %p150 = scmp.ne.s32.totalorder %s136, %s137
      %p151 = scmp.eq.s32.totalorder %s24, 1
      %p152 = por %p150, %p151
      %p154 = scmp.ne.s32.totalorder %s137, %s153
      %p155 = scmp.eq.s32.totalorder %s24, 0
      %p156 = por %p154, %p155
      %p157 = scmp.le.s32.totalorder 1, %s18
      %p158 = scmp.lt.s32.totalorder %s18, 3
      %p159 = pnand %p157, %p158
      %p160 = pneg %p159
      // Predicated region
      $region9: #{tpu_custom_call.1} parent=5 // pred_check
        _
      $region10: #{tpu_custom_call.1} parent=5 // pred_check_branch
        %162 = sbr.rel (%p159) target = $region12
      $region11: #{tpu_custom_call.1} parent=5 // pred_region
        %s163 = ssub.s32 %s18, 1
        // Predicated region
        $region13: #{tpu_custom_call.1} parent=11 // pred_check
          %p164 = pneg %p79
        $region14: #{tpu_custom_call.1} parent=11 // pred_check_branch
          %166 = sbr.rel (%p164) target = $region16
        $region15: #{tpu_custom_call.1} parent=11 // pred_region
          %s168 = ssub.s32 256, 256
          %169 = vsyncadd [#allocation7], %s168
          %s170 = sshll.u32 [#allocation6], 4
          %s171 = int_to_ptr.vmem [resolvable:$true] %s170
          %176 = dma.hbm_to_vmem [thread:$0]  %s1, 256, %s171, [#allocation7], 128, 128, 8
        $region16: #{tpu_custom_call.1} parent=11 // pred_fallthru
          _
        // Predicated region
        $region17: #{tpu_custom_call.1} parent=11 // pred_check
          %p177 = pneg %p100
        $region18: #{tpu_custom_call.1} parent=11 // pred_check_branch
          %179 = sbr.rel (%p177) target = $region20
        $region19: #{tpu_custom_call.1} parent=11 // pred_region
          %s181 = ssub.s32 256, 256
          %182 = vsyncadd [#allocation7], %s181
          %s183 = sshll.u32 [#allocation8], 4
          %s184 = int_to_ptr.vmem [resolvable:$true] %s183
          %189 = dma.hbm_to_vmem [thread:$0]  %s2, 256, %s184, [#allocation7], 128, 128, 8
        $region20: #{tpu_custom_call.1} parent=11 // pred_fallthru
          _
        // Predicated region
        $region21: #{tpu_custom_call.1} parent=11 // pred_check
          %p190 = pneg %p121
        $region22: #{tpu_custom_call.1} parent=11 // pred_check_branch
          %192 = sbr.rel (%p190) target = $region24
        $region23: #{tpu_custom_call.1} parent=11 // pred_region
          %s194 = ssub.s32 512, 512
          %195 = vsyncadd [#allocation10], %s194
          %s196 = sshll.u32 [#allocation9], 4
          %s197 = int_to_ptr.vmem [resolvable:$true] %s196
          %202 = dma.hbm_to_vmem [thread:$0]  %s3, 512, %s197, [#allocation10], 128, 128, 8
        $region24: #{tpu_custom_call.1} parent=11 // pred_fallthru
          _
      $region12: #{tpu_custom_call.1} parent=5 // pred_fallthru
        _
      %p203 = scmp.lt.s32.totalorder %s18, 2
      // Predicated region
      $region25: #{tpu_custom_call.1} parent=5 // pred_check
        %p204 = pneg %p203
      $region26: #{tpu_custom_call.1} parent=5 // pred_check_branch
        %206 = sbr.rel (%p204) target = $region28
      $region27: #{tpu_custom_call.1} parent=5 // pred_region
        // Predicated region
        $region29: #{tpu_custom_call.1} parent=27 // pred_check
          %p207 = pneg %p52
        $region30: #{tpu_custom_call.1} parent=27 // pred_check_branch
          %209 = sbr.rel (%p207) target = $region32
        $region31: #{tpu_custom_call.1} parent=27 // pred_region
          %s210 = sand.u32 %s42, 1
          %s211 = scalar_lea.sflag [#allocation4], %s210
          %s212 = sand.u32 %s42, 1
          %s213 = smul.addr %s212, 64
          %s214 = scalar_lea.vmem [#allocation3], %s213
          %s215 = smul.u32 4, %s26
          %s217 = ssub.s32 1024, 1024
          %218 = vsyncadd %s211, %s217
          %s219 = smul.addr %s215, 2
          %s220 = smul.addr %s25, 8
          %s221 = sadd.s32 %s219, %s220
          %s222 = smul.addr %s221, 128
          %s223 = scalar_lea.hbm %s0, %s222
          %s224 = sshll.u32 %s214, 4
          %s225 = int_to_ptr.vmem [resolvable:$true] %s224
          %230 = dma.hbm_to_vmem [thread:$0]  %s223, 1024, %s225, %s211, 128, 128, 8
        $region32: #{tpu_custom_call.1} parent=27 // pred_fallthru
          _
      $region28: #{tpu_custom_call.1} parent=5 // pred_fallthru
        _
      %p231 = scmp.le.s32.totalorder 1, %s18
      %p232 = scmp.lt.s32.totalorder %s18, 3
      %p233 = pnand %p231, %p232
      %p234 = pneg %p233
      // Predicated region
      $region33: #{tpu_custom_call.1} parent=5 // pred_check
        _
      $region34: #{tpu_custom_call.1} parent=5 // pred_check_branch
        %236 = sbr.rel (%p233) target = $region36
      $region35: #{tpu_custom_call.1} parent=5 // pred_region
        %s237 = ssub.s32 %s18, 1
        %s238 = sand.u32 %s45, 1
        %s239 = scalar_lea.sflag [#allocation4], %s238
        %s240 = sand.u32 %s45, 1
        %s241 = smul.addr %s240, 64
        %s242 = scalar_lea.vmem [#allocation3], %s241
        // Predicated region
        $region37: #{tpu_custom_call.1} parent=35 // pred_check
          %p243 = pneg %p58
        $region38: #{tpu_custom_call.1} parent=35 // pred_check_branch
          %245 = sbr.rel (%p243) target = $region40
        $region39: #{tpu_custom_call.1} parent=35 // pred_region
          %246 = dma.done %s239, 1024
        $region40: #{tpu_custom_call.1} parent=35 // pred_fallthru
          _
        // Predicated region
        $region41: #{tpu_custom_call.1} parent=35 // pred_check
          %p247 = pneg %p79
        $region42: #{tpu_custom_call.1} parent=35 // pred_check_branch
          %249 = sbr.rel (%p247) target = $region44
        $region43: #{tpu_custom_call.1} parent=35 // pred_region
          %250 = dma.done [#allocation7], 256
        $region44: #{tpu_custom_call.1} parent=35 // pred_fallthru
          _
        // Predicated region
        $region45: #{tpu_custom_call.1} parent=35 // pred_check
          %p251 = pneg %p100
        $region46: #{tpu_custom_call.1} parent=35 // pred_check_branch
          %253 = sbr.rel (%p251) target = $region48
        $region47: #{tpu_custom_call.1} parent=35 // pred_region
          %254 = dma.done [#allocation7], 256
        $region48: #{tpu_custom_call.1} parent=35 // pred_fallthru
          _
        // Predicated region
        $region49: #{tpu_custom_call.1} parent=35 // pred_check
          %p255 = pneg %p121
        $region50: #{tpu_custom_call.1} parent=35 // pred_check_branch
          %257 = sbr.rel (%p255) target = $region52
        $region51: #{tpu_custom_call.1} parent=35 // pred_region
          %258 = dma.done [#allocation10], 512
        $region52: #{tpu_custom_call.1} parent=35 // pred_fallthru
          _
        %s259 = sand.u32 %s45, 1
        %s260 = scalar_lea.sflag [#allocation4], %s259
        %s261 = sand.u32 %s45, 1
        %s262 = smul.addr %s261, 64
        %s263 = scalar_lea.vmem [#allocation3], %s262
        %p264 = pneg %p58
        %p265 = pneg %p55
        %p266 = pneg %p79
        %p267 = pneg %p76
        %p268 = pneg %p100
        %p269 = pneg %p97
        %p270 = pneg %p121
        %p271 = pneg %p118
        %p272 = pneg %p149
        %p273 = pneg %p146
        %s274 = sand.u32 %s136, 1
        %s275 = scalar_lea.sflag [#allocation5], %s274
        %s276 = sand.u32 %s136, 1
        %s277 = smul.addr %s276, 128
        %s278 = scalar_lea.vmem [#allocation11], %s277
        %s279 = smul.u32 4, %s28
        %s280 = smul.u32 4, %s28
        %v281 = vld [vmem:[%s242] sm:$0xff]
        %v282 = vld [vmem:[%s242 + $0x8] sm:$0xff]
        %v283 = vld [vmem:[%s242 + $0x10] sm:$0xff]
        %v284 = vld [vmem:[%s242 + $0x18] sm:$0xff]
        %v285 = vld [vmem:[%s242 + $0x20] sm:$0xff]
        %v286 = vld [vmem:[%s242 + $0x28] sm:$0xff]
        %v287 = vld [vmem:[%s242 + $0x30] sm:$0xff]
        %v288 = vld [vmem:[%s242 + $0x38] sm:$0xff]
        %v289 = vld [vmem:[#allocation6] sm:$0xff]
        %v290 = vld [vmem:[#allocation6 + $0x8] sm:$0xff]
        %vm291 = vcmask 130048
        %v293 = vsel %vm291, %v281, 0
        %v296 = vsel %vm291, %v282, 0
        %v299 = vsel %vm291, %v283, 0
        %v302 = vsel %vm291, %v284, 0
        %v305 = vsel %vm291, %v285, 0
        %v308 = vsel %vm291, %v286, 0
        %v311 = vsel %vm291, %v287, 0
        %v314 = vsel %vm291, %v288, 0
        %316 = vmatprep.subr.mxu0 0.0
        %317 = vmatpush1.msra.mxu0 %v289
        %318 = vmatprep.subr.mxu0 0.0
        %319 = vmatpush1.msra.mxu0 %v290
        %320 = vmatprep.subr.mxu0 0.0
        %321 = vmatpush1.msra.mxu0 0.0
        %322 = vmatprep.subr.mxu0 0.0
        %323 = vmatpush1.msra.mxu0 0.0
        %324 = vmatprep.subr.mxu0 0.0
        %325 = vmatpush1.msra.mxu0 0.0
        %326 = vmatprep.subr.mxu0 0.0
        %327 = vmatpush1.msra.mxu0 0.0
        %328 = vmatprep.subr.mxu0 0.0
        %329 = vmatpush1.msra.mxu0 0.0
        %330 = vmatprep.subr.mxu0 0.0
        %331 = vmatpush1.msra.mxu0 0.0
        %332 = vmatprep.subr.mxu0 0.0
        %333 = vmatpush1.msra.mxu0 0.0
        %334 = vmatprep.subr.mxu0 0.0
        %335 = vmatpush1.msra.mxu0 0.0
        %336 = vmatprep.subr.mxu0 0.0
        %337 = vmatpush1.msra.mxu0 0.0
        %338 = vmatprep.subr.mxu0 0.0
        %339 = vmatpush1.msra.mxu0 0.0
        %340 = vmatprep.subr.mxu0 0.0
        %341 = vmatpush1.msra.mxu0 0.0
        %342 = vmatprep.subr.mxu0 0.0
        %343 = vmatpush1.msra.mxu0 0.0
        %344 = vmatprep.subr.mxu0 0.0
        %345 = vmatpush1.msra.mxu0 0.0
        %346 = vmatprep.subr.mxu0 0.0
        %347 = vmatpush1.msra.mxu0 0.0
        %348 = vmatprep.subr.mxu0 0.0
        %349 = vmatpush1.msra.mxu0 0.0
        %350 = vmatprep.subr.mxu0 0.0
        %351 = vmatpush1.msra.mxu0 0.0
        %352 = vmatprep.subr.mxu0 0.0
        %353 = vmatpush1.msra.mxu0 0.0
        %354 = vmatprep.subr.mxu0 0.0
        %355 = vmatpush1.msra.mxu0 0.0
        %356 = vmatprep.subr.mxu0 0.0
        %357 = vmatpush1.msra.mxu0 0.0
        %358 = vmatprep.subr.mxu0 0.0
        %359 = vmatpush1.msra.mxu0 0.0
        %360 = vmatprep.subr.mxu0 0.0
        %361 = vmatpush1.msra.mxu0 0.0
        %362 = vmatprep.subr.mxu0 0.0
        %363 = vmatpush1.msra.mxu0 0.0
        %364 = vmatprep.subr.mxu0 0.0
        %365 = vmatpush1.msra.mxu0 0.0
        %366 = vmatprep.subr.mxu0 0.0
        %367 = vmatpush1.msra.mxu0 0.0
        %368 = vmatprep.subr.mxu0 0.0
        %369 = vmatpush1.msra.mxu0 0.0
        %370 = vmatprep.subr.mxu0 0.0
        %371 = vmatpush1.msra.mxu0 0.0
        %372 = vmatprep.subr.mxu0 0.0
        %373 = vmatpush1.msra.mxu0 0.0
        %374 = vmatprep.subr.mxu0 0.0
        %375 = vmatpush1.msra.mxu0 0.0
        %376 = vmatprep.subr.mxu0 0.0
        %377 = vmatpush1.msra.mxu0 0.0
        %378 = vmatprep.subr.mxu0 0.0
        %379 = vmatpush1.msra.mxu0 0.0
        %380 = vmatprep.mubr.f32.mxu0 0.0
        %381 = vmatmul.mubr.f32.gmra.mrb[0].mxu0 %v293
        %v382 = vpop.f32.mrb[0].mxu0
        %v383 = vadd.f32 0.0, %v382
        %v384 = vpop.f32.mrb[0].mxu0
        %385 = vmatprep.mubr.f32.mxu0 0.0
        %386 = vmatmul.mubr.f32.gmra.mrb[0].mxu0 %v296
        %v387 = vpop.f32.mrb[0].mxu0
        %v388 = vadd.f32 0.0, %v387
        %v389 = vpop.f32.mrb[0].mxu0
        %390 = vmatprep.mubr.f32.mxu0 0.0
        %391 = vmatmul.mubr.f32.gmra.mrb[0].mxu0 %v299
        %v392 = vpop.f32.mrb[0].mxu0
        %v393 = vadd.f32 0.0, %v392
        %v394 = vpop.f32.mrb[0].mxu0
        %395 = vmatprep.mubr.f32.mxu0 0.0
        %396 = vmatmul.mubr.f32.gmra.mrb[0].mxu0 %v302
        %v397 = vpop.f32.mrb[0].mxu0
        %v398 = vadd.f32 0.0, %v397
        %v399 = vpop.f32.mrb[0].mxu0
        %400 = vmatprep.mubr.f32.mxu0 0.0
        %401 = vmatmul.mubr.f32.gmra.mrb[0].mxu0 %v305
        %v402 = vpop.f32.mrb[0].mxu0
        %v403 = vadd.f32 0.0, %v402
        %v404 = vpop.f32.mrb[0].mxu0
        %405 = vmatprep.mubr.f32.mxu0 0.0
        %406 = vmatmul.mubr.f32.gmra.mrb[0].mxu0 %v308
        %v407 = vpop.f32.mrb[0].mxu0
        %v408 = vadd.f32 0.0, %v407
        %v409 = vpop.f32.mrb[0].mxu0
        %410 = vmatprep.mubr.f32.mxu0 0.0
        %411 = vmatmul.mubr.f32.gmra.mrb[0].mxu0 %v311
        %v412 = vpop.f32.mrb[0].mxu0
        %v413 = vadd.f32 0.0, %v412
        %v414 = vpop.f32.mrb[0].mxu0
        %415 = vmatprep.mubr.f32.mxu0 0.0
        %416 = vmatmul.mubr.f32.gmra.mrb[0].mxu0 %v314
        %v417 = vpop.f32.mrb[0].mxu0
        %v418 = vadd.f32 0.0, %v417
        %v419 = vpop.f32.mrb[0].mxu0
        %420 = vdwg.mxu0
        %vm421 = vcmask 261120
        %422 = vst.msk [vmem:[#allocation2] sm:$0xff] %vm421, %v383
        %423 = vst.msk [vmem:[#allocation2 + $0x8] sm:$0xff] %vm421, %v388
        %424 = vst.msk [vmem:[#allocation2 + $0x20] sm:$0xff] %vm421, %v393
        %425 = vst.msk [vmem:[#allocation2 + $0x28] sm:$0xff] %vm421, %v398
        %426 = vst.msk [vmem:[#allocation2 + $0x40] sm:$0xff] %vm421, %v403
        %427 = vst.msk [vmem:[#allocation2 + $0x48] sm:$0xff] %vm421, %v408
        %428 = vst.msk [vmem:[#allocation2 + $0x60] sm:$0xff] %vm421, %v413
        %429 = vst.msk [vmem:[#allocation2 + $0x68] sm:$0xff] %vm421, %v418
        %v430 = vld [vmem:[#allocation8] sm:$0xff]
        %v431 = vld [vmem:[#allocation8 + $0x8] sm:$0xff]
        %432 = vmatprep.subr.mxu0 0.0
        %433 = vmatpush1.msra.mxu0 %v430
        %434 = vmatprep.subr.mxu0 0.0
        %435 = vmatpush1.msra.mxu0 %v431
        %436 = vmatprep.subr.mxu0 0.0
        %437 = vmatpush1.msra.mxu0 0.0
        %438 = vmatprep.subr.mxu0 0.0
        %439 = vmatpush1.msra.mxu0 0.0
        %440 = vmatprep.subr.mxu0 0.0
        %441 = vmatpush1.msra.mxu0 0.0
        %442 = vmatprep.subr.mxu0 0.0
        %443 = vmatpush1.msra.mxu0 0.0
        %444 = vmatprep.subr.mxu0 0.0
        %445 = vmatpush1.msra.mxu0 0.0
        %446 = vmatprep.subr.mxu0 0.0
        %447 = vmatpush1.msra.mxu0 0.0
        %448 = vmatprep.subr.mxu0 0.0
        %449 = vmatpush1.msra.mxu0 0.0
        %450 = vmatprep.subr.mxu0 0.0
        %451 = vmatpush1.msra.mxu0 0.0
        %452 = vmatprep.subr.mxu0 0.0
        %453 = vmatpush1.msra.mxu0 0.0
        %454 = vmatprep.subr.mxu0 0.0
        %455 = vmatpush1.msra.mxu0 0.0
        %456 = vmatprep.subr.mxu0 0.0
        %457 = vmatpush1.msra.mxu0 0.0
        %458 = vmatprep.subr.mxu0 0.0
        %459 = vmatpush1.msra.mxu0 0.0
        %460 = vmatprep.subr.mxu0 0.0
        %461 = vmatpush1.msra.mxu0 0.0
        %462 = vmatprep.subr.mxu0 0.0
        %463 = vmatpush1.msra.mxu0 0.0
        %464 = vmatprep.subr.mxu0 0.0
        %465 = vmatpush1.msra.mxu0 0.0
        %466 = vmatprep.subr.mxu0 0.0
        %467 = vmatpush1.msra.mxu0 0.0
        %468 = vmatprep.subr.mxu0 0.0
        %469 = vmatpush1.msra.mxu0 0.0
        %470 = vmatprep.subr.mxu0 0.0
        %471 = vmatpush1.msra.mxu0 0.0
        %472 = vmatprep.subr.mxu0 0.0
        %473 = vmatpush1.msra.mxu0 0.0
        %474 = vmatprep.subr.mxu0 0.0
        %475 = vmatpush1.msra.mxu0 0.0
        %476 = vmatprep.subr.mxu0 0.0
        %477 = vmatpush1.msra.mxu0 0.0
        %478 = vmatprep.subr.mxu0 0.0
        %479 = vmatpush1.msra.mxu0 0.0
        %480 = vmatprep.subr.mxu0 0.0
        %481 = vmatpush1.msra.mxu0 0.0
        %482 = vmatprep.subr.mxu0 0.0
        %483 = vmatpush1.msra.mxu0 0.0
        %484 = vmatprep.subr.mxu0 0.0
        %485 = vmatpush1.msra.mxu0 0.0
        %486 = vmatprep.subr.mxu0 0.0
        %487 = vmatpush1.msra.mxu0 0.0
        %488 = vmatprep.subr.mxu0 0.0
        %489 = vmatpush1.msra.mxu0 0.0
        %490 = vmatprep.subr.mxu0 0.0
        %491 = vmatpush1.msra.mxu0 0.0
        %492 = vmatprep.subr.mxu0 0.0
        %493 = vmatpush1.msra.mxu0 0.0
        %494 = vmatprep.subr.mxu0 0.0
        %495 = vmatpush1.msra.mxu0 0.0
        %496 = vmatprep.mubr.f32.mxu0 0.0
        %497 = vmatmul.mubr.f32.gmra.mrb[0].mxu0 %v293
        %v498 = vpop.f32.mrb[0].mxu0
        %v499 = vadd.f32 0.0, %v498
        %v500 = vpop.f32.mrb[0].mxu0
        %501 = vmatprep.mubr.f32.mxu0 0.0
        %502 = vmatmul.mubr.f32.gmra.mrb[0].mxu0 %v296
        %v503 = vpop.f32.mrb[0].mxu0
        %v504 = vadd.f32 0.0, %v503
        %v505 = vpop.f32.mrb[0].mxu0
        %506 = vmatprep.mubr.f32.mxu0 0.0
        %507 = vmatmul.mubr.f32.gmra.mrb[0].mxu0 %v299
        %v508 = vpop.f32.mrb[0].mxu0
        %v509 = vadd.f32 0.0, %v508
        %v510 = vpop.f32.mrb[0].mxu0
        %511 = vmatprep.mubr.f32.mxu0 0.0
        %512 = vmatmul.mubr.f32.gmra.mrb[0].mxu0 %v302
        %v513 = vpop.f32.mrb[0].mxu0
        %v514 = vadd.f32 0.0, %v513
        %v515 = vpop.f32.mrb[0].mxu0
        %516 = vmatprep.mubr.f32.mxu0 0.0
        %517 = vmatmul.mubr.f32.gmra.mrb[0].mxu0 %v305
        %v518 = vpop.f32.mrb[0].mxu0
        %v519 = vadd.f32 0.0, %v518
        %v520 = vpop.f32.mrb[0].mxu0
        %521 = vmatprep.mubr.f32.mxu0 0.0
        %522 = vmatmul.mubr.f32.gmra.mrb[0].mxu0 %v308
        %v523 = vpop.f32.mrb[0].mxu0
        %v524 = vadd.f32 0.0, %v523
        %v525 = vpop.f32.mrb[0].mxu0
        %526 = vmatprep.mubr.f32.mxu0 0.0
        %527 = vmatmul.mubr.f32.gmra.mrb[0].mxu0 %v311
        %v528 = vpop.f32.mrb[0].mxu0
        %v529 = vadd.f32 0.0, %v528
        %v530 = vpop.f32.mrb[0].mxu0
        %531 = vmatprep.mubr.f32.mxu0 0.0
        %532 = vmatmul.mubr.f32.gmra.mrb[0].mxu0 %v314
        %v533 = vpop.f32.mrb[0].mxu0
        %v534 = vadd.f32 0.0, %v533
        %v535 = vpop.f32.mrb[0].mxu0
        %536 = vdwg.mxu0
        %537 = vst.msk [vmem:[#allocation2 + $0x10] sm:$0xff] %vm421, %v499
        %538 = vst.msk [vmem:[#allocation2 + $0x18] sm:$0xff] %vm421, %v504
        %539 = vst.msk [vmem:[#allocation2 + $0x30] sm:$0xff] %vm421, %v509
        %540 = vst.msk [vmem:[#allocation2 + $0x38] sm:$0xff] %vm421, %v514
        %541 = vst.msk [vmem:[#allocation2 + $0x50] sm:$0xff] %vm421, %v519
        %542 = vst.msk [vmem:[#allocation2 + $0x58] sm:$0xff] %vm421, %v524
        %543 = vst.msk [vmem:[#allocation2 + $0x70] sm:$0xff] %vm421, %v529
        %544 = vst.msk [vmem:[#allocation2 + $0x78] sm:$0xff] %vm421, %v534
        %v545 = vld [vmem:[#allocation9] sm:$0xff]
        %v546 = vld [vmem:[#allocation9 + $0x8] sm:$0xff]
        %v547 = vld [vmem:[#allocation9 + $0x10] sm:$0xff]
        %v548 = vld [vmem:[#allocation9 + $0x18] sm:$0xff]
        %v549 = vld [vmem:[#allocation2] sm:$0xff]
        %v550 = vld [vmem:[#allocation2 + $0x8] sm:$0xff]
        %v551 = vld [vmem:[#allocation2 + $0x10] sm:$0xff]
        %v552 = vld [vmem:[#allocation2 + $0x18] sm:$0xff]
        %v554 = vsel %vm421, %v545, 0
        %v557 = vsel %vm421, %v546, 0
        %v560 = vsel %vm421, %v547, 0
        %v563 = vsel %vm421, %v548, 0
        %565 = vmatprep.subr.mxu0 0.0
        %566 = vmatpush1.msra.mxu0 %v549
        %567 = vmatprep.subr.mxu0 0.0
        %568 = vmatpush1.msra.mxu0 %v550
        %569 = vmatprep.subr.mxu0 0.0
        %570 = vmatpush1.msra.mxu0 %v551
        %571 = vmatprep.subr.mxu0 0.0
        %572 = vmatpush1.msra.mxu0 %v552
        %573 = vmatprep.subr.mxu0 0.0
        %574 = vmatpush1.msra.mxu0 0.0
        %575 = vmatprep.subr.mxu0 0.0
        %576 = vmatpush1.msra.mxu0 0.0
        %577 = vmatprep.subr.mxu0 0.0
        %578 = vmatpush1.msra.mxu0 0.0
        %579 = vmatprep.subr.mxu0 0.0
        %580 = vmatpush1.msra.mxu0 0.0
        %581 = vmatprep.subr.mxu0 0.0
        %582 = vmatpush1.msra.mxu0 0.0
        %583 = vmatprep.subr.mxu0 0.0
        %584 = vmatpush1.msra.mxu0 0.0
        %585 = vmatprep.subr.mxu0 0.0
        %586 = vmatpush1.msra.mxu0 0.0
        %587 = vmatprep.subr.mxu0 0.0
        %588 = vmatpush1.msra.mxu0 0.0
        %589 = vmatprep.subr.mxu0 0.0
        %590 = vmatpush1.msra.mxu0 0.0
        %591 = vmatprep.subr.mxu0 0.0
        %592 = vmatpush1.msra.mxu0 0.0
        %593 = vmatprep.subr.mxu0 0.0
        %594 = vmatpush1.msra.mxu0 0.0
        %595 = vmatprep.subr.mxu0 0.0
        %596 = vmatpush1.msra.mxu0 0.0
        %597 = vmatprep.subr.mxu0 0.0
        %598 = vmatpush1.msra.mxu0 0.0
        %599 = vmatprep.subr.mxu0 0.0
        %600 = vmatpush1.msra.mxu0 0.0
        %601 = vmatprep.subr.mxu0 0.0
        %602 = vmatpush1.msra.mxu0 0.0
        %603 = vmatprep.subr.mxu0 0.0
        %604 = vmatpush1.msra.mxu0 0.0
        %605 = vmatprep.subr.mxu0 0.0
        %606 = vmatpush1.msra.mxu0 0.0
        %607 = vmatprep.subr.mxu0 0.0
        %608 = vmatpush1.msra.mxu0 0.0
        %609 = vmatprep.subr.mxu0 0.0
        %610 = vmatpush1.msra.mxu0 0.0
        %611 = vmatprep.subr.mxu0 0.0
        %612 = vmatpush1.msra.mxu0 0.0
        %613 = vmatprep.subr.mxu0 0.0
        %614 = vmatpush1.msra.mxu0 0.0
        %615 = vmatprep.subr.mxu0 0.0
        %616 = vmatpush1.msra.mxu0 0.0
        %617 = vmatprep.subr.mxu0 0.0
        %618 = vmatpush1.msra.mxu0 0.0
        %619 = vmatprep.subr.mxu0 0.0
        %620 = vmatpush1.msra.mxu0 0.0
        %621 = vmatprep.subr.mxu0 0.0
        %622 = vmatpush1.msra.mxu0 0.0
        %623 = vmatprep.subr.mxu0 0.0
        %624 = vmatpush1.msra.mxu0 0.0
        %625 = vmatprep.subr.mxu0 0.0
        %626 = vmatpush1.msra.mxu0 0.0
        %627 = vmatprep.subr.mxu0 0.0
        %628 = vmatpush1.msra.mxu0 0.0
        %629 = vmatprep.mubr.f32.mxu0 0.0
        %630 = vmatmul.mubr.f32.gmra.mrb[0].mxu0 %v554
        %v631 = vpop.f32.mrb[0].mxu0
        %v632 = vadd.f32 0.0, %v631
        %v633 = vpop.f32.mrb[0].mxu0
        %634 = vmatprep.mubr.f32.mxu0 0.0
        %635 = vmatmul.mubr.f32.gmra.mrb[0].mxu0 %v557
        %v636 = vpop.f32.mrb[0].mxu0
        %v637 = vadd.f32 0.0, %v636
        %v638 = vpop.f32.mrb[0].mxu0
        %639 = vmatprep.mubr.f32.mxu0 0.0
        %640 = vmatmul.mubr.f32.gmra.mrb[0].mxu0 %v560
        %v641 = vpop.f32.mrb[0].mxu0
        %v642 = vadd.f32 0.0, %v641
        %v643 = vpop.f32.mrb[0].mxu0
        %644 = vmatprep.mubr.f32.mxu0 0.0
        %645 = vmatmul.mubr.f32.gmra.mrb[0].mxu0 %v563
        %v646 = vpop.f32.mrb[0].mxu0
        %v647 = vadd.f32 0.0, %v646
        %v648 = vpop.f32.mrb[0].mxu0
        %649 = vdwg.mxu0
        %650 = vst.msk [vmem:[%s278] sm:$0xff] %vm421, %v632
        %651 = vst.msk [vmem:[%s278 + $0x8] sm:$0xff] %vm421, %v637
        %652 = vst.msk [vmem:[%s278 + $0x10] sm:$0xff] %vm421, %v642
        %653 = vst.msk [vmem:[%s278 + $0x18] sm:$0xff] %vm421, %v647
        %v654 = vld [vmem:[#allocation9] sm:$0xff]
        %v655 = vld [vmem:[#allocation9 + $0x8] sm:$0xff]
        %v656 = vld [vmem:[#allocation9 + $0x10] sm:$0xff]
        %v657 = vld [vmem:[#allocation9 + $0x18] sm:$0xff]
        %s658 = scalar_lea.vmem [#allocation2], 32
        %v659 = vld [vmem:[%s658] sm:$0xff]
        %v660 = vld [vmem:[%s658 + $0x8] sm:$0xff]
        %v661 = vld [vmem:[%s658 + $0x10] sm:$0xff]
        %v662 = vld [vmem:[%s658 + $0x18] sm:$0xff]
        %v664 = vsel %vm421, %v654, 0
        %v667 = vsel %vm421, %v655, 0
        %v670 = vsel %vm421, %v656, 0
        %v673 = vsel %vm421, %v657, 0
        %675 = vmatprep.subr.mxu0 0.0
        %676 = vmatpush1.msra.mxu0 %v659
        %677 = vmatprep.subr.mxu0 0.0
        %678 = vmatpush1.msra.mxu0 %v660
        %679 = vmatprep.subr.mxu0 0.0
        %680 = vmatpush1.msra.mxu0 %v661
        %681 = vmatprep.subr.mxu0 0.0
        %682 = vmatpush1.msra.mxu0 %v662
        %683 = vmatprep.subr.mxu0 0.0
        %684 = vmatpush1.msra.mxu0 0.0
        %685 = vmatprep.subr.mxu0 0.0
        %686 = vmatpush1.msra.mxu0 0.0
        %687 = vmatprep.subr.mxu0 0.0
        %688 = vmatpush1.msra.mxu0 0.0
        %689 = vmatprep.subr.mxu0 0.0
        %690 = vmatpush1.msra.mxu0 0.0
        %691 = vmatprep.subr.mxu0 0.0
        %692 = vmatpush1.msra.mxu0 0.0
        %693 = vmatprep.subr.mxu0 0.0
        %694 = vmatpush1.msra.mxu0 0.0
        %695 = vmatprep.subr.mxu0 0.0
        %696 = vmatpush1.msra.mxu0 0.0
        %697 = vmatprep.subr.mxu0 0.0
        %698 = vmatpush1.msra.mxu0 0.0
        %699 = vmatprep.subr.mxu0 0.0
        %700 = vmatpush1.msra.mxu0 0.0
        %701 = vmatprep.subr.mxu0 0.0
        %702 = vmatpush1.msra.mxu0 0.0
        %703 = vmatprep.subr.mxu0 0.0
        %704 = vmatpush1.msra.mxu0 0.0
        %705 = vmatprep.subr.mxu0 0.0
        %706 = vmatpush1.msra.mxu0 0.0
        %707 = vmatprep.subr.mxu0 0.0
        %708 = vmatpush1.msra.mxu0 0.0
        %709 = vmatprep.subr.mxu0 0.0
        %710 = vmatpush1.msra.mxu0 0.0
        %711 = vmatprep.subr.mxu0 0.0
        %712 = vmatpush1.msra.mxu0 0.0
        %713 = vmatprep.subr.mxu0 0.0
        %714 = vmatpush1.msra.mxu0 0.0
        %715 = vmatprep.subr.mxu0 0.0
        %716 = vmatpush1.msra.mxu0 0.0
        %717 = vmatprep.subr.mxu0 0.0
        %718 = vmatpush1.msra.mxu0 0.0
        %719 = vmatprep.subr.mxu0 0.0
        %720 = vmatpush1.msra.mxu0 0.0
        %721 = vmatprep.subr.mxu0 0.0
        %722 = vmatpush1.msra.mxu0 0.0
        %723 = vmatprep.subr.mxu0 0.0
        %724 = vmatpush1.msra.mxu0 0.0
        %725 = vmatprep.subr.mxu0 0.0
        %726 = vmatpush1.msra.mxu0 0.0
        %727 = vmatprep.subr.mxu0 0.0
        %728 = vmatpush1.msra.mxu0 0.0
        %729 = vmatprep.subr.mxu0 0.0
        %730 = vmatpush1.msra.mxu0 0.0
        %731 = vmatprep.subr.mxu0 0.0
        %732 = vmatpush1.msra.mxu0 0.0
        %733 = vmatprep.subr.mxu0 0.0
        %734 = vmatpush1.msra.mxu0 0.0
        %735 = vmatprep.subr.mxu0 0.0
        %736 = vmatpush1.msra.mxu0 0.0
        %737 = vmatprep.subr.mxu0 0.0
        %738 = vmatpush1.msra.mxu0 0.0
        %739 = vmatprep.mubr.f32.mxu0 0.0
        %740 = vmatmul.mubr.f32.gmra.mrb[0].mxu0 %v664
        %v741 = vpop.f32.mrb[0].mxu0
        %v742 = vadd.f32 0.0, %v741
        %v743 = vpop.f32.mrb[0].mxu0
        %744 = vmatprep.mubr.f32.mxu0 0.0
        %745 = vmatmul.mubr.f32.gmra.mrb[0].mxu0 %v667
        %v746 = vpop.f32.mrb[0].mxu0
        %v747 = vadd.f32 0.0, %v746
        %v748 = vpop.f32.mrb[0].mxu0
        %749 = vmatprep.mubr.f32.mxu0 0.0
        %750 = vmatmul.mubr.f32.gmra.mrb[0].mxu0 %v670
        %v751 = vpop.f32.mrb[0].mxu0
        %v752 = vadd.f32 0.0, %v751
        %v753 = vpop.f32.mrb[0].mxu0
        %754 = vmatprep.mubr.f32.mxu0 0.0
        %755 = vmatmul.mubr.f32.gmra.mrb[0].mxu0 %v673
        %v756 = vpop.f32.mrb[0].mxu0
        %v757 = vadd.f32 0.0, %v756
        %v758 = vpop.f32.mrb[0].mxu0
        %759 = vdwg.mxu0
        %s760 = scalar_lea.vmem %s278, 32 [#allocation11]
        %761 = vst.msk [vmem:[%s760] sm:$0xff] %vm421, %v742
        %762 = vst.msk [vmem:[%s760 + $0x8] sm:$0xff] %vm421, %v747
        %763 = vst.msk [vmem:[%s760 + $0x10] sm:$0xff] %vm421, %v752
        %764 = vst.msk [vmem:[%s760 + $0x18] sm:$0xff] %vm421, %v757
        %v765 = vld [vmem:[#allocation9] sm:$0xff]
        %v766 = vld [vmem:[#allocation9 + $0x8] sm:$0xff]
        %v767 = vld [vmem:[#allocation9 + $0x10] sm:$0xff]
        %v768 = vld [vmem:[#allocation9 + $0x18] sm:$0xff]
        %s769 = scalar_lea.vmem [#allocation2], 64
        %v770 = vld [vmem:[%s769] sm:$0xff]
        %v771 = vld [vmem:[%s769 + $0x8] sm:$0xff]
        %v772 = vld [vmem:[%s769 + $0x10] sm:$0xff]
        %v773 = vld [vmem:[%s769 + $0x18] sm:$0xff]
        %v775 = vsel %vm421, %v765, 0
        %v778 = vsel %vm421, %v766, 0
        %v781 = vsel %vm421, %v767, 0
        %v784 = vsel %vm421, %v768, 0
        %786 = vmatprep.subr.mxu0 0.0
        %787 = vmatpush1.msra.mxu0 %v770
        %788 = vmatprep.subr.mxu0 0.0
        %789 = vmatpush1.msra.mxu0 %v771
        %790 = vmatprep.subr.mxu0 0.0
        %791 = vmatpush1.msra.mxu0 %v772
        %792 = vmatprep.subr.mxu0 0.0
        %793 = vmatpush1.msra.mxu0 %v773
        %794 = vmatprep.subr.mxu0 0.0
        %795 = vmatpush1.msra.mxu0 0.0
        %796 = vmatprep.subr.mxu0 0.0
        %797 = vmatpush1.msra.mxu0 0.0
        %798 = vmatprep.subr.mxu0 0.0
        %799 = vmatpush1.msra.mxu0 0.0
        %800 = vmatprep.subr.mxu0 0.0
        %801 = vmatpush1.msra.mxu0 0.0
        %802 = vmatprep.subr.mxu0 0.0
        %803 = vmatpush1.msra.mxu0 0.0
        %804 = vmatprep.subr.mxu0 0.0
        %805 = vmatpush1.msra.mxu0 0.0
        %806 = vmatprep.subr.mxu0 0.0
        %807 = vmatpush1.msra.mxu0 0.0
        %808 = vmatprep.subr.mxu0 0.0
        %809 = vmatpush1.msra.mxu0 0.0
        %810 = vmatprep.subr.mxu0 0.0
        %811 = vmatpush1.msra.mxu0 0.0
        %812 = vmatprep.subr.mxu0 0.0
        %813 = vmatpush1.msra.mxu0 0.0
        %814 = vmatprep.subr.mxu0 0.0
        %815 = vmatpush1.msra.mxu0 0.0
        %816 = vmatprep.subr.mxu0 0.0
        %817 = vmatpush1.msra.mxu0 0.0
        %818 = vmatprep.subr.mxu0 0.0
        %819 = vmatpush1.msra.mxu0 0.0
        %820 = vmatprep.subr.mxu0 0.0
        %821 = vmatpush1.msra.mxu0 0.0
        %822 = vmatprep.subr.mxu0 0.0
        %823 = vmatpush1.msra.mxu0 0.0
        %824 = vmatprep.subr.mxu0 0.0
        %825 = vmatpush1.msra.mxu0 0.0
        %826 = vmatprep.subr.mxu0 0.0
        %827 = vmatpush1.msra.mxu0 0.0
        %828 = vmatprep.subr.mxu0 0.0
        %829 = vmatpush1.msra.mxu0 0.0
        %830 = vmatprep.subr.mxu0 0.0
        %831 = vmatpush1.msra.mxu0 0.0
        %832 = vmatprep.subr.mxu0 0.0
        %833 = vmatpush1.msra.mxu0 0.0
        %834 = vmatprep.subr.mxu0 0.0
        %835 = vmatpush1.msra.mxu0 0.0
        %836 = vmatprep.subr.mxu0 0.0
        %837 = vmatpush1.msra.mxu0 0.0
        %838 = vmatprep.subr.mxu0 0.0
        %839 = vmatpush1.msra.mxu0 0.0
        %840 = vmatprep.subr.mxu0 0.0
        %841 = vmatpush1.msra.mxu0 0.0
        %842 = vmatprep.subr.mxu0 0.0
        %843 = vmatpush1.msra.mxu0 0.0
        %844 = vmatprep.subr.mxu0 0.0
        %845 = vmatpush1.msra.mxu0 0.0
        %846 = vmatprep.subr.mxu0 0.0
        %847 = vmatpush1.msra.mxu0 0.0
        %848 = vmatprep.subr.mxu0 0.0
        %849 = vmatpush1.msra.mxu0 0.0
        %850 = vmatprep.mubr.f32.mxu0 0.0
        %851 = vmatmul.mubr.f32.gmra.mrb[0].mxu0 %v775
        %v852 = vpop.f32.mrb[0].mxu0
        %v853 = vadd.f32 0.0, %v852
        %v854 = vpop.f32.mrb[0].mxu0
        %855 = vmatprep.mubr.f32.mxu0 0.0
        %856 = vmatmul.mubr.f32.gmra.mrb[0].mxu0 %v778
        %v857 = vpop.f32.mrb[0].mxu0
        %v858 = vadd.f32 0.0, %v857
        %v859 = vpop.f32.mrb[0].mxu0
        %860 = vmatprep.mubr.f32.mxu0 0.0
        %861 = vmatmul.mubr.f32.gmra.mrb[0].mxu0 %v781
        %v862 = vpop.f32.mrb[0].mxu0
        %v863 = vadd.f32 0.0, %v862
        %v864 = vpop.f32.mrb[0].mxu0
        %865 = vmatprep.mubr.f32.mxu0 0.0
        %866 = vmatmul.mubr.f32.gmra.mrb[0].mxu0 %v784
        %v867 = vpop.f32.mrb[0].mxu0
        %v868 = vadd.f32 0.0, %v867
        %v869 = vpop.f32.mrb[0].mxu0
        %870 = vdwg.mxu0
        %s871 = scalar_lea.vmem %s278, 64 [#allocation11]
        %872 = vst.msk [vmem:[%s871] sm:$0xff] %vm421, %v853
        %873 = vst.msk [vmem:[%s871 + $0x8] sm:$0xff] %vm421, %v858
        %874 = vst.msk [vmem:[%s871 + $0x10] sm:$0xff] %vm421, %v863
        %875 = vst.msk [vmem:[%s871 + $0x18] sm:$0xff] %vm421, %v868
        %v876 = vld [vmem:[#allocation9] sm:$0xff]
        %v877 = vld [vmem:[#allocation9 + $0x8] sm:$0xff]
        %v878 = vld [vmem:[#allocation9 + $0x10] sm:$0xff]
        %v879 = vld [vmem:[#allocation9 + $0x18] sm:$0xff]
        %s880 = scalar_lea.vmem [#allocation2], 96
        %v881 = vld [vmem:[%s880] sm:$0xff]
        %v882 = vld [vmem:[%s880 + $0x8] sm:$0xff]
        %v883 = vld [vmem:[%s880 + $0x10] sm:$0xff]
        %v884 = vld [vmem:[%s880 + $0x18] sm:$0xff]
        %v886 = vsel %vm421, %v876, 0
        %v889 = vsel %vm421, %v877, 0
        %v892 = vsel %vm421, %v878, 0
        %v895 = vsel %vm421, %v879, 0
        %897 = vmatprep.subr.mxu0 0.0
        %898 = vmatpush1.msra.mxu0 %v881
        %899 = vmatprep.subr.mxu0 0.0
        %900 = vmatpush1.msra.mxu0 %v882
        %901 = vmatprep.subr.mxu0 0.0
        %902 = vmatpush1.msra.mxu0 %v883
        %903 = vmatprep.subr.mxu0 0.0
        %904 = vmatpush1.msra.mxu0 %v884
        %905 = vmatprep.subr.mxu0 0.0
        %906 = vmatpush1.msra.mxu0 0.0
        %907 = vmatprep.subr.mxu0 0.0
        %908 = vmatpush1.msra.mxu0 0.0
        %909 = vmatprep.subr.mxu0 0.0
        %910 = vmatpush1.msra.mxu0 0.0
        %911 = vmatprep.subr.mxu0 0.0
        %912 = vmatpush1.msra.mxu0 0.0
        %913 = vmatprep.subr.mxu0 0.0
        %914 = vmatpush1.msra.mxu0 0.0
        %915 = vmatprep.subr.mxu0 0.0
        %916 = vmatpush1.msra.mxu0 0.0
        %917 = vmatprep.subr.mxu0 0.0
        %918 = vmatpush1.msra.mxu0 0.0
        %919 = vmatprep.subr.mxu0 0.0
        %920 = vmatpush1.msra.mxu0 0.0
        %921 = vmatprep.subr.mxu0 0.0
        %922 = vmatpush1.msra.mxu0 0.0
        %923 = vmatprep.subr.mxu0 0.0
        %924 = vmatpush1.msra.mxu0 0.0
        %925 = vmatprep.subr.mxu0 0.0
        %926 = vmatpush1.msra.mxu0 0.0
        %927 = vmatprep.subr.mxu0 0.0
        %928 = vmatpush1.msra.mxu0 0.0
        %929 = vmatprep.subr.mxu0 0.0
        %930 = vmatpush1.msra.mxu0 0.0
        %931 = vmatprep.subr.mxu0 0.0
        %932 = vmatpush1.msra.mxu0 0.0
        %933 = vmatprep.subr.mxu0 0.0
        %934 = vmatpush1.msra.mxu0 0.0
        %935 = vmatprep.subr.mxu0 0.0
        %936 = vmatpush1.msra.mxu0 0.0
        %937 = vmatprep.subr.mxu0 0.0
        %938 = vmatpush1.msra.mxu0 0.0
        %939 = vmatprep.subr.mxu0 0.0
        %940 = vmatpush1.msra.mxu0 0.0
        %941 = vmatprep.subr.mxu0 0.0
        %942 = vmatpush1.msra.mxu0 0.0
        %943 = vmatprep.subr.mxu0 0.0
        %944 = vmatpush1.msra.mxu0 0.0
        %945 = vmatprep.subr.mxu0 0.0
        %946 = vmatpush1.msra.mxu0 0.0
        %947 = vmatprep.subr.mxu0 0.0
        %948 = vmatpush1.msra.mxu0 0.0
        %949 = vmatprep.subr.mxu0 0.0
        %950 = vmatpush1.msra.mxu0 0.0
        %951 = vmatprep.subr.mxu0 0.0
        %952 = vmatpush1.msra.mxu0 0.0
        %953 = vmatprep.subr.mxu0 0.0
        %954 = vmatpush1.msra.mxu0 0.0
        %955 = vmatprep.subr.mxu0 0.0
        %956 = vmatpush1.msra.mxu0 0.0
        %957 = vmatprep.subr.mxu0 0.0
        %958 = vmatpush1.msra.mxu0 0.0
        %959 = vmatprep.subr.mxu0 0.0
        %960 = vmatpush1.msra.mxu0 0.0
        %961 = vmatprep.mubr.f32.mxu0 0.0
        %962 = vmatmul.mubr.f32.gmra.mrb[0].mxu0 %v886
        %v963 = vpop.f32.mrb[0].mxu0
        %v964 = vadd.f32 0.0, %v963
        %v965 = vpop.f32.mrb[0].mxu0
        %966 = vmatprep.mubr.f32.mxu0 0.0
        %967 = vmatmul.mubr.f32.gmra.mrb[0].mxu0 %v889
        %v968 = vpop.f32.mrb[0].mxu0
        %v969 = vadd.f32 0.0, %v968
        %v970 = vpop.f32.mrb[0].mxu0
        %971 = vmatprep.mubr.f32.mxu0 0.0
        %972 = vmatmul.mubr.f32.gmra.mrb[0].mxu0 %v892
        %v973 = vpop.f32.mrb[0].mxu0
        %v974 = vadd.f32 0.0, %v973
        %v975 = vpop.f32.mrb[0].mxu0
        %976 = vmatprep.mubr.f32.mxu0 0.0
        %977 = vmatmul.mubr.f32.gmra.mrb[0].mxu0 %v895
        %v978 = vpop.f32.mrb[0].mxu0
        %v979 = vadd.f32 0.0, %v978
        %v980 = vpop.f32.mrb[0].mxu0
        %981 = vdwg.mxu0
        %s982 = scalar_lea.vmem %s278, 96 [#allocation11]
        %983 = vst.msk [vmem:[%s982] sm:$0xff] %vm421, %v964
        %984 = vst.msk [vmem:[%s982 + $0x8] sm:$0xff] %vm421, %v969
        %985 = vst.msk [vmem:[%s982 + $0x10] sm:$0xff] %vm421, %v974
        %986 = vst.msk [vmem:[%s982 + $0x18] sm:$0xff] %vm421, %v979
        %s987 = sand.u32 %s136, 1
        %s988 = scalar_lea.sflag [#allocation5], %s987
        %s989 = sand.u32 %s136, 1
        %s990 = smul.addr %s989, 128
        %s991 = scalar_lea.vmem [#allocation11], %s990
        // Predicated region
        $region53: #{tpu_custom_call.1} parent=35 // pred_check
          %p992 = pneg %p146
        $region54: #{tpu_custom_call.1} parent=35 // pred_check_branch
          %994 = sbr.rel (%p992) target = $region56
        $region55: #{tpu_custom_call.1} parent=35 // pred_region
          %s995 = smul.u32 4, %s28
          %s997 = ssub.s32 2048, 2048
          %998 = vsyncadd %s988, %s997
          %s999 = smul.addr %s995, 4
          %s1000 = smul.addr %s27, 16
          %s1001 = sadd.s32 %s999, %s1000
          %s1002 = smul.addr %s1001, 128
          %s1003 = scalar_lea.hbm %s4, %s1002
          %s1004 = sshll.u32 %s991, 4
          %s1005 = int_to_ptr.vmem [resolvable:$true] %s1004
          %1010 = dma.vmem_to_hbm [thread:$0]  %s1005, 2048, %s1003, %s988, 128, 128, 8
        $region56: #{tpu_custom_call.1} parent=35 // pred_fallthru
          _
      $region36: #{tpu_custom_call.1} parent=5 // pred_fallthru
        _
      %p1011 = scmp.le.s32.totalorder 2, %s18
      // Predicated region
      $region57: #{tpu_custom_call.1} parent=5 // pred_check
        %p1012 = pneg %p1011
      $region58: #{tpu_custom_call.1} parent=5 // pred_check_branch
        %1014 = sbr.rel (%p1012) target = $region60
      $region59: #{tpu_custom_call.1} parent=5 // pred_region
        %s1015 = ssub.s32 %s18, 2
        // Predicated region
        $region61: #{tpu_custom_call.1} parent=59 // pred_check
          %p1016 = pneg %p152
        $region62: #{tpu_custom_call.1} parent=59 // pred_check_branch
          %1018 = sbr.rel (%p1016) target = $region64
        $region63: #{tpu_custom_call.1} parent=59 // pred_region
          %s1019 = sand.u32 %s137, 1
          %s1020 = scalar_lea.sflag [#allocation5], %s1019
          %s1021 = sand.u32 %s137, 1
          %s1022 = smul.addr %s1021, 128
          %s1023 = scalar_lea.vmem [#allocation11], %s1022
          %1024 = dma.done %s1020, 2048
        $region64: #{tpu_custom_call.1} parent=59 // pred_fallthru
          _
      $region60: #{tpu_custom_call.1} parent=5 // pred_fallthru
        _
    $region6: #{tpu_custom_call.1} parent=1 // loop_footer
      %s22 = sadd.s32 1, %s18
    $region7: #{tpu_custom_call.1} parent=1 // loop_footer_branch
      %17 = sbr.rel target = $region3
    $region8: #{tpu_custom_call.1} parent=1 // loop_exit
      _
    %1025 = vsyncpa [#allocation4], 1
    %s1026 = scalar_lea.sflag [#allocation4], 1
    %1027 = vsyncpa %s1026, 1
    %1028 = vsyncpa [#allocation7], 1
    %1029 = vsyncpa [#allocation10], 1
    %1030 = vsyncpa [#allocation5], 1
    %s1031 = scalar_lea.sflag [#allocation5], 1
    %1032 = vsyncpa %s1031, 1

</llo_original>
